<compile_context>
chip_gen: v6e
topology: v6e:2x2x1
jax: 0.10.0
libtpu: 0.0.40
codegen_flags: <defaults>
</compile_context>

<pallas_src>
import functools

import jax
import jax.numpy as jnp
from jax.experimental import pallas as pl
from jax.experimental.pallas import tpu as pltpu


def _round_up(x, m):
    return ((x + m - 1) // m) * m


def _nce_loss_kernel(pos_ref, q_ref, k_ref, out_ref, m_sc, l_sc, *, n_valid):
    """Grid = (num_q_blocks, num_k_blocks); k axis is the online-softmax reduction.

    pos_ref: (TQ, 1)  f32   positive logit per query row (already / temp)
    q_ref  : (TQ, Dp) bf16  normalized rows * (1/temp)
    k_ref  : (TK, Dp) bf16  normalized rows
    out_ref: (TQ, 1)  f32   per-row loss contribution (lse - pos), 0 for pad rows
    m_sc/l_sc: (TQ, 1) f32  running max / running sum-of-exp
    """
    qi = pl.program_id(0)
    ki = pl.program_id(1)
    tq = q_ref.shape[0]
    tk = k_ref.shape[0]

    @pl.when(ki == 0)
    def _():
        m_sc[...] = jnp.full((tq, 1), -jnp.inf, dtype=jnp.float32)
        l_sc[...] = jnp.zeros((tq, 1), dtype=jnp.float32)

    # (TQ, TK) logits tile: bf16 MXU matmul, f32 accumulation, contraction on D.
    s = jax.lax.dot_general(
        q_ref[...], k_ref[...],
        dimension_numbers=(((1,), (1,)), ((), ())),
        preferred_element_type=jnp.float32)

    # Exclude the diagonal (self-similarity) and padded key columns with one mask;
    # exp(-inf) == 0 so the same masked tile feeds both the max and the exp.
    row = qi * tq + jax.lax.broadcasted_iota(jnp.int32, (tq, tk), 0)
    col = ki * tk + jax.lax.broadcasted_iota(jnp.int32, (tq, tk), 1)
    s = jnp.where((row == col) | (col >= n_valid), -jnp.inf, s)

    # Online logsumexp update.
    m_prev = m_sc[...]
    m_new = jnp.maximum(m_prev, jnp.max(s, axis=-1, keepdims=True))
    alpha = jnp.exp(m_prev - m_new)
    l_sc[...] = alpha * l_sc[...] + jnp.sum(jnp.exp(s - m_new), axis=-1,
                                            keepdims=True)
    m_sc[...] = m_new

    @pl.when(ki == pl.num_programs(1) - 1)
    def _():
        lse = m_sc[...] + jnp.log(l_sc[...])                      # (TQ, 1)
        rows = qi * tq + jax.lax.broadcasted_iota(jnp.int32, (tq, 1), 0)
        contrib = jnp.where(rows < n_valid, lse - pos_ref[...], 0.0)
        out_ref[...] = contrib.astype(out_ref.dtype)


def nce_loss(emb1, emb2, *, temp):
    """NT-Xent loss matching NCELoss.forward(emb1, emb2)."""
    bs, d = emb1.shape
    assert emb2.shape == (bs, d)
    n = 2 * bs
    inv_temp = jnp.float32(1.0 / temp)

    # --- cheap O(N*D) preprocessing in the wrapper (fused by XLA) ---
    emb = jnp.concatenate([emb1, emb2], axis=0).astype(jnp.float32)   # (N, D)
    sq = jnp.sum(emb * emb, axis=-1, keepdims=True)
    emb_n = emb * jax.lax.rsqrt(jnp.maximum(sq, jnp.float32(1e-16)))  # unit rows

    # Analytic positives: cos(e1_i, e2_i)/temp, identical for rows i and i+bs.
    p = jnp.sum(emb_n[:bs] * emb_n[bs:], axis=-1) * inv_temp
    pos = jnp.concatenate([p, p])[:, None].astype(jnp.float32)        # (N, 1)

    # Query side carries the 1/temp scale; both sides go to the MXU as bf16.
    q = (emb_n * inv_temp).astype(jnp.bfloat16)
    k = emb_n.astype(jnp.bfloat16)

    # --- tiling: 256-aligned for big batches (v6e/v7x MXU), full-N for tiny ones.
    # 256x256 f32 sim tile + two double-buffered (256, Dp) bf16 blocks stays well
    # under the default scoped VMEM on v5e/v6e/v7x for typical embedding dims.
    if n >= 256:
        tq = tk = 256
    else:
        tq = tk = _round_up(n, 8)
    n_pad = _round_up(n, tq)
    d_pad = _round_up(d, 128)   # lane-dense loads, full MXU contraction

    q = jnp.pad(q, ((0, n_pad - n), (0, d_pad - d)))
    k = jnp.pad(k, ((0, n_pad - n), (0, d_pad - d)))
    pos = jnp.pad(pos, ((0, n_pad - n), (0, 0)))

    grid = (n_pad // tq, n_pad // tk)
    kernel = functools.partial(_nce_loss_kernel, n_valid=n)

    per_row = pl.pallas_call(
        kernel,
        out_shape=jax.ShapeDtypeStruct((n_pad, 1), jnp.float32),
        grid_spec=pltpu.PrefetchScalarGridSpec(
            num_scalar_prefetch=0,
            grid=grid,
            in_specs=[
                pl.BlockSpec((tq, 1), lambda qi, ki: (qi, 0)),       # positives
                pl.BlockSpec((tq, d_pad), lambda qi, ki: (qi, 0)),   # queries
                pl.BlockSpec((tk, d_pad), lambda qi, ki: (ki, 0)),   # keys
            ],
            out_specs=pl.BlockSpec((tq, 1), lambda qi, ki: (qi, 0)),
            scratch_shapes=[
                pltpu.VMEM((tq, 1), jnp.float32),   # running max m
                pltpu.VMEM((tq, 1), jnp.float32),   # running sum-of-exp l
            ],
        ),
        compiler_params=pltpu.CompilerParams(
            dimension_semantics=("parallel", "arbitrary")),
    )(pos, q, k)

    return jnp.sum(per_row) / jnp.float32(n)


def nce_loss_ref(emb1, emb2, *, temp):
    """Pure-JAX f32 reference mirroring the PyTorch module."""
    bs = emb1.shape[0]
    n = 2 * bs
    emb = jnp.concatenate([emb1, emb2], axis=0).astype(jnp.float32)
    norm = jnp.linalg.norm(emb, axis=-1, keepdims=True)
    sim = (emb @ emb.T) / jnp.maximum(norm * norm.T, 1e-8) / temp
    idx = jnp.arange(n)
    pos = sim[idx, (idx + bs) % n]
    sim_no_diag = jnp.where(idx[:, None] == idx[None, :], -jnp.inf, sim)
    lse = jax.scipy.special.logsumexp(sim_no_diag, axis=-1)
    return jnp.sum(lse - pos) / n


if __name__ == "__main__":
    temp = 0.5
    key = jax.random.PRNGKey(0)

    # Case 1: the module's toy configuration (single-tile grid).
    k1, k2 = jax.random.split(key)
    emb1 = jax.random.normal(k1, (4, 32), dtype=jnp.float32)
    emb2 = jax.random.normal(k2, (4, 32), dtype=jnp.float32)
    loss = jax.block_until_ready(nce_loss(emb1, emb2, temp=temp))
    ref = jax.block_until_ready(nce_loss_ref(emb1, emb2, temp=temp))
    assert jnp.isfinite(loss), "loss is not finite"
    # Tolerance covers bf16 MXU inputs (f32 accumulation); structure is exact.
    assert abs(float(loss) - float(ref)) < 5e-2, f"mismatch: {loss} vs {ref}"

    # Case 2: exercises the tiled grid (2x2 blocks), row padding and D padding.
    k3, k4 = jax.random.split(k2)
    emb1b = jax.random.normal(k3, (200, 96), dtype=jnp.float32)
    emb2b = jax.random.normal(k4, (200, 96), dtype=jnp.float32)
    loss_b = jax.block_until_ready(nce_loss(emb1b, emb2b, temp=temp))
    ref_b = jax.block_until_ready(nce_loss_ref(emb1b, emb2b, temp=temp))
    assert jnp.isfinite(loss_b), "loss is not finite"
    assert abs(float(loss_b) - float(ref_b)) < 5e-2, f"mismatch: {loss_b} vs {ref_b}"

    print("KERNEL_OK")
</pallas_src>

<mosaic_0001>
module attributes {stable_mosaic.version = 11 : i64} {
  func.func @_nce_loss_kernel(%arg0: i32, %arg1: i32, %arg2: memref<8x1xf32, #tpu.memory_space<vmem>>, %arg3: memref<8x128xbf16, #tpu.memory_space<vmem>>, %arg4: memref<8x128xbf16, #tpu.memory_space<vmem>>, %arg5: memref<8x1xf32, #tpu.memory_space<vmem>>, %arg6: memref<8x1xf32, #tpu.memory_space<vmem>>, %arg7: memref<8x1xf32, #tpu.memory_space<vmem>>) attributes {dimension_semantics = [#tpu.dimension_semantics<parallel>, #tpu.dimension_semantics<arbitrary>], iteration_bounds = array<i64: 1, 1>, scalar_prefetch = 0 : i64, scratch_operands = 2 : i64, tpu.core_type = #tpu.core_type<tc>, window_params = [{transform_indices = @transform_0, window_bounds = array<i64: 8, 1>}, {transform_indices = @transform_1, window_bounds = array<i64: 8, 128>}, {transform_indices = @transform_2, window_bounds = array<i64: 8, 128>}, {transform_indices = @transform_3, window_bounds = array<i64: 8, 1>}]} {
    %c0_i32 = arith.constant 0 : i32
    %0 = arith.cmpi eq, %arg1, %c0_i32 : i32
    %1 = arith.extui %0 : i1 to i32
    %c0_i32_0 = arith.constant 0 : i32
    %2 = arith.cmpi ne, %1, %c0_i32_0 : i32
    scf.if %2 {
      %cst_19 = arith.constant 0xFF800000 : f32
      %39 = vector.broadcast %cst_19 : f32 to vector<8x1xf32>
      %c0_20 = arith.constant 0 : index
      %c0_21 = arith.constant 0 : index
      %40 = vector.load %arg6[%c0_20, %c0_21] : memref<8x1xf32, #tpu.memory_space<vmem>>, vector<8x1xf32>
      tpu.vector_store %arg6[%c0_20, %c0_21], %39 {strides = array<i32>} : memref<8x1xf32, #tpu.memory_space<vmem>>, vector<8x1xf32>,
      %cst_22 = arith.constant 0.000000e+00 : f32
      %41 = vector.broadcast %cst_22 : f32 to vector<8x1xf32>
      %c0_23 = arith.constant 0 : index
      %c0_24 = arith.constant 0 : index
      %42 = vector.load %arg7[%c0_23, %c0_24] : memref<8x1xf32, #tpu.memory_space<vmem>>, vector<8x1xf32>
      tpu.vector_store %arg7[%c0_23, %c0_24], %41 {strides = array<i32>} : memref<8x1xf32, #tpu.memory_space<vmem>>, vector<8x1xf32>,
    } else {
    }
    %c0 = arith.constant 0 : index
    %c0_1 = arith.constant 0 : index
    %3 = vector.load %arg3[%c0, %c0_1] : memref<8x128xbf16, #tpu.memory_space<vmem>>, vector<8x128xbf16>
    %c0_2 = arith.constant 0 : index
    %c0_3 = arith.constant 0 : index
    %4 = vector.load %arg4[%c0_2, %c0_3] : memref<8x128xbf16, #tpu.memory_space<vmem>>, vector<8x128xbf16>
    %cst = arith.constant dense<0.000000e+00> : vector<8x8xf32>
    %5 = tpu.matmul %3, %4, %cst {dimension_numbers = #tpu.dot_dimension_numbers<[1], [1], [0], [0], [0, 0, 1, 0], [], []>} : vector<8x128xbf16>, vector<8x128xbf16>, vector<8x8xf32> -> vector<8x8xf32>
    %c8_i32 = arith.constant 8 : i32
    %6 = arith.muli %arg0, %c8_i32 : i32
    %7 = tpu.iota {dimensions = array<i32: 0>} : vector<8x8xi32>
    %8 = vector.broadcast %6 : i32 to vector<8x8xi32>
    %9 = arith.addi %8, %7 : vector<8x8xi32>
    %c8_i32_4 = arith.constant 8 : i32
    %10 = arith.muli %arg1, %c8_i32_4 : i32
    %11 = tpu.iota {dimensions = array<i32: 1>} : vector<8x8xi32>
    %12 = vector.broadcast %10 : i32 to vector<8x8xi32>
    %13 = arith.addi %12, %11 : vector<8x8xi32>
    %14 = arith.cmpi eq, %9, %13 : vector<8x8xi32>
    %c8_i32_5 = arith.constant 8 : i32
    %15 = vector.broadcast %c8_i32_5 : i32 to vector<8x8xi32>
    %16 = arith.cmpi sge, %13, %15 : vector<8x8xi32>
    %17 = arith.ori %14, %16 : vector<8x8xi1>
    %cst_6 = arith.constant 0xFF800000 : f32
    %18 = vector.broadcast %cst_6 : f32 to vector<8x8xf32>
    %19 = arith.select %17, %18, %5 : vector<8x8xi1>, vector<8x8xf32>
    %c0_7 = arith.constant 0 : index
    %c0_8 = arith.constant 0 : index
    %20 = vector.load %arg6[%c0_7, %c0_8] : memref<8x1xf32, #tpu.memory_space<vmem>>, vector<8x1xf32>
    %cst_9 = arith.constant dense<0xFF800000> : vector<8xf32>
    %21 = vector.multi_reduction <maximumf>, %19, %cst_9 [1] : vector<8x8xf32> to vector<8xf32>
    %22 = vector.shape_cast %21 : vector<8xf32> to vector<8x1xf32>
    %23 = arith.maximumf %20, %22 : vector<8x1xf32>
    %24 = arith.subf %20, %23 : vector<8x1xf32>
    %25 = math.exp %24 : vector<8x1xf32>
    %c0_10 = arith.constant 0 : index
    %c0_11 = arith.constant 0 : index
    %26 = vector.load %arg7[%c0_10, %c0_11] : memref<8x1xf32, #tpu.memory_space<vmem>>, vector<8x1xf32>
    %27 = arith.mulf %25, %26 : vector<8x1xf32>
    %28 = vector.broadcast %23 : vector<8x1xf32> to vector<8x8xf32>
    %29 = arith.subf %19, %28 : vector<8x8xf32>
    %30 = math.exp %29 : vector<8x8xf32>
    %cst_12 = arith.constant dense<0.000000e+00> : vector<8xf32>
    %31 = vector.multi_reduction <add>, %30, %cst_12 [1] : vector<8x8xf32> to vector<8xf32>
    %32 = vector.shape_cast %31 : vector<8xf32> to vector<8x1xf32>
    %33 = arith.addf %27, %32 : vector<8x1xf32>
    %c0_13 = arith.constant 0 : index
    %c0_14 = arith.constant 0 : index
    %34 = vector.load %arg7[%c0_13, %c0_14] : memref<8x1xf32, #tpu.memory_space<vmem>>, vector<8x1xf32>
    tpu.vector_store %arg7[%c0_13, %c0_14], %33 {strides = array<i32>} : memref<8x1xf32, #tpu.memory_space<vmem>>, vector<8x1xf32>,
    %c0_15 = arith.constant 0 : index
    %c0_16 = arith.constant 0 : index
    %35 = vector.load %arg6[%c0_15, %c0_16] : memref<8x1xf32, #tpu.memory_space<vmem>>, vector<8x1xf32>
    tpu.vector_store %arg6[%c0_15, %c0_16], %23 {strides = array<i32>} : memref<8x1xf32, #tpu.memory_space<vmem>>, vector<8x1xf32>,
    %c0_i32_17 = arith.constant 0 : i32
    %36 = arith.cmpi eq, %arg1, %c0_i32_17 : i32
    %37 = arith.extui %36 : i1 to i32
    %c0_i32_18 = arith.constant 0 : i32
    %38 = arith.cmpi ne, %37, %c0_i32_18 : i32
    scf.if %38 {
      %c0_19 = arith.constant 0 : index
      %c0_20 = arith.constant 0 : index
      %39 = vector.load %arg6[%c0_19, %c0_20] : memref<8x1xf32, #tpu.memory_space<vmem>>, vector<8x1xf32>
      %c0_21 = arith.constant 0 : index
      %c0_22 = arith.constant 0 : index
      %40 = vector.load %arg7[%c0_21, %c0_22] : memref<8x1xf32, #tpu.memory_space<vmem>>, vector<8x1xf32>
      %41 = math.log %40 : vector<8x1xf32>
      %42 = arith.addf %39, %41 : vector<8x1xf32>
      %c8_i32_23 = arith.constant 8 : i32
      %43 = arith.muli %arg0, %c8_i32_23 : i32
      %44 = tpu.iota {dimensions = array<i32: 0>} : vector<8x1xi32>
      %45 = vector.broadcast %43 : i32 to vector<8x1xi32>
      %46 = arith.addi %45, %44 : vector<8x1xi32>
      %c8_i32_24 = arith.constant 8 : i32
      %47 = vector.broadcast %c8_i32_24 : i32 to vector<8x1xi32>
      %48 = arith.cmpi slt, %46, %47 : vector<8x1xi32>
      %c0_25 = arith.constant 0 : index
      %c0_26 = arith.constant 0 : index
      %49 = vector.load %arg2[%c0_25, %c0_26] : memref<8x1xf32, #tpu.memory_space<vmem>>, vector<8x1xf32>
      %50 = arith.subf %42, %49 : vector<8x1xf32>
      %cst_27 = arith.constant 0.000000e+00 : f32
      %51 = vector.broadcast %cst_27 : f32 to vector<8x1xf32>
      %52 = arith.select %48, %50, %51 : vector<8x1xi1>, vector<8x1xf32>
      %c0_28 = arith.constant 0 : index
      %c0_29 = arith.constant 0 : index
      %53 = vector.load %arg5[%c0_28, %c0_29] : memref<8x1xf32, #tpu.memory_space<vmem>>, vector<8x1xf32>
      tpu.vector_store %arg5[%c0_28, %c0_29], %52 {strides = array<i32>} : memref<8x1xf32, #tpu.memory_space<vmem>>, vector<8x1xf32>,
    } else {
    }
    return
  }
  func.func @transform_0(%arg0: i32, %arg1: i32) -> (i32, i32) {
    %c0_i32 = arith.constant 0 : i32
    %c0_i32_0 = arith.constant 0 : i32
    return %arg0, %c0_i32 : i32, i32
  }
  func.func @transform_1(%arg0: i32, %arg1: i32) -> (i32, i32) {
    %c0_i32 = arith.constant 0 : i32
    %c0_i32_0 = arith.constant 0 : i32
    return %arg0, %c0_i32 : i32, i32
  }
  func.func @transform_2(%arg0: i32, %arg1: i32) -> (i32, i32) {
    %c0_i32 = arith.constant 0 : i32
    %c0_i32_0 = arith.constant 0 : i32
    return %arg1, %c0_i32 : i32, i32
  }
  func.func @transform_3(%arg0: i32, %arg1: i32) -> (i32, i32) {
    %c0_i32 = arith.constant 0 : i32
    %c0_i32_0 = arith.constant 0 : i32
    return %arg0, %c0_i32 : i32, i32
  }
}

</mosaic_0001>

<llo_original>
// kernel: tpu_custom_call.1
$region0: #{tpu_custom_call.1}
  #allocation0 [shape = 'u32[]', space=smem, size = 0x4, offset = 0x4, fixed_abs, tag = 'smem constant byte address 0x4 - core index']
  #allocation1 [shape = 'u32[144,128]{1,0:T(1,128)}', space=vmem, size = 0x12000, scoped, tag = 'internal scratch']
  #allocation2 [shape = 'f32[8,1]{1,0:T(8,128)}', space=vmem, size = 0x1000, scoped, tag = 'scratch operand']
  #allocation3 [shape = 'f32[8,1]{1,0:T(8,128)}', space=vmem, size = 0x1000, scoped, tag = 'scratch operand']
  %s0 = inlined_call_operand.vmem [shape: f32[8,1], index: 0, kind: input, shape index: {}]
  %s1 = inlined_call_operand.vmem [shape: bf16[8,128], index: 1, kind: input, shape index: {}]
  %s2 = inlined_call_operand.vmem [shape: bf16[8,128], index: 2, kind: input, shape index: {}]
  %s3 = inlined_call_operand.vmem [shape: f32[8,1], index: 3, kind: output, shape index: {}]
  %s4 = sld [smem:[#allocation0]]
  $region30: #{tpu_custom_call.1} parent=0
    _
  %s6 = ssub.s32 1, %s4
  %s7 = scalar_select 0, %s6, %s4
  // Predicated region
  $region2: #{tpu_custom_call.1} parent=0 // pred_check
    _
  $region3: #{tpu_custom_call.1} parent=0 // pred_check_branch
    %9 = sbr.rel (0) target = $region5
  $region4: #{tpu_custom_call.1} parent=0 // pred_region
    _
  $region5: #{tpu_custom_call.1} parent=0 // pred_fallthru
    _
  // Predicated region
  $region6: #{tpu_custom_call.1} parent=0 // pred_check
    _
  $region7: #{tpu_custom_call.1} parent=0 // pred_check_branch
    %11 = sbr.rel (0) target = $region9
  $region8: #{tpu_custom_call.1} parent=0 // pred_region
    _
  $region9: #{tpu_custom_call.1} parent=0 // pred_fallthru
    _
  // Predicated region
  $region10: #{tpu_custom_call.1} parent=0 // pred_check
    _
  $region11: #{tpu_custom_call.1} parent=0 // pred_check_branch
    %13 = sbr.rel (0) target = $region13
  $region12: #{tpu_custom_call.1} parent=0 // pred_region
    _
  $region13: #{tpu_custom_call.1} parent=0 // pred_fallthru
    _
  %p15 = scmp.eq.s32.totalorder 0, 0
  // Predicated region
  $region14: #{tpu_custom_call.1} parent=0 // pred_check
    %p16 = pneg %p15
  $region15: #{tpu_custom_call.1} parent=0 // pred_check_branch
    %18 = sbr.rel (%p16) target = $region17
  $region16: #{tpu_custom_call.1} parent=0 // pred_region
    %vm19 = vcmask 7168
    %20 = vst.msk [vmem:[#allocation2] sm:$0xff] %vm19, -inf
    %21 = vst.msk [vmem:[#allocation3] sm:$0xff] %vm19, 0.0
  $region17: #{tpu_custom_call.1} parent=0 // pred_fallthru
    _
  %v22 = vld [vmem:[%s1] sm:$0xf]
  %v23 = vld [vmem:[%s2] sm:$0xf]
  %24 = vmatprep.subr.bf16.mxu0 0
  %25 = vmatpush1.bf16.xpose.msra.mxu0 0
  %26 = vmatprep.subr.bf16.mxu0 0
  %27 = vmatpush1.bf16.xpose.msra.mxu0 0
  %28 = vmatprep.subr.bf16.mxu0 0
  %29 = vmatpush1.bf16.xpose.msra.mxu0 0
  %30 = vmatprep.subr.bf16.mxu0 0
  %31 = vmatpush1.bf16.xpose.msra.mxu0 0
  %32 = vmatprep.subr.bf16.mxu0 0
  %33 = vmatpush1.bf16.xpose.msra.mxu0 0
  %34 = vmatprep.subr.bf16.mxu0 0
  %35 = vmatpush1.bf16.xpose.msra.mxu0 0
  %36 = vmatprep.subr.bf16.mxu0 0
  %37 = vmatpush1.bf16.xpose.msra.mxu0 0
  %38 = vmatprep.subr.bf16.mxu0 0
  %39 = vmatpush1.bf16.xpose.msra.mxu0 %v23
  %40 = vmatprep.subr.bf16.mxu0 0
  %41 = vmatpush2.bf16.xpose.msra.mxu0 0
  %42 = vmatprep.subr.bf16.mxu0 0
  %43 = vmatpush2.bf16.xpose.msra.mxu0 0
  %44 = vmatprep.subr.bf16.mxu0 0
  %45 = vmatpush2.bf16.xpose.msra.mxu0 0
  %46 = vmatprep.subr.bf16.mxu0 0
  %47 = vmatpush2.bf16.xpose.msra.mxu0 0
  %48 = vmatprep.subr.bf16.mxu0 0
  %49 = vmatpush2.bf16.xpose.msra.mxu0 0
  %50 = vmatprep.subr.bf16.mxu0 0
  %51 = vmatpush2.bf16.xpose.msra.mxu0 0
  %52 = vmatprep.subr.bf16.mxu0 0
  %53 = vmatpush2.bf16.xpose.msra.mxu0 0
  %54 = vmatprep.subr.bf16.mxu0 0
  %55 = vmatpush2.bf16.xpose.msra.mxu0 0
  %56 = vmatprep.mubr.bf16.mxu0 0
  %57 = vmatmul.mubr.bf16.gmra.mxu0 %v22
  %v58 = vpop.f32.mrf.mxu0
  %v59 = vadd.f32 0.0, %v58
  %v60 = vpop.f32.mrf.mxu0
  %v61 = vpop.f32.mrf.mxu0
  %v62 = vpop.f32.mrf.mxu0
  %63 = vdwg.mxu0
  %s64 = smul.u32 0, 8
  %v65 = vlaneseq
  %v66 = vshrl.u32 %v65, 7
  %v67 = vstv %s64
  %v68 = vadd.s32 %v67, %v66
  %s69 = smul.u32 0, 8
  %v70 = vlaneseq
  %v71 = vand.u32 %v70, 127
  %v72 = vstv %s69
  %v73 = vadd.s32 %v72, %v71
  %vm74 = vcmp.eq.s32.totalorder %v68, %v73
  %vm75 = vcmp.ge.s32.totalorder %v73, 8
  %vm76 = vmor %vm74, %vm75
  %v77 = vsel %vm76, -inf, %v59
  %v78 = vld [vmem:[#allocation2] sm:$0xff]
  %vm79 = vcmask 64512
  %v80 = vsel %vm79, %v77, -inf
  %81 = vmax.xlane.f32.xlu0 %v80
  %v82 = vpop.xlane.xlu0 %81
  %v83 = vmax.f32 %v78, %v82
  %v84 = vsub.f32 %v78, %v83
  %v85 = vmul.f32 %v84, 1.442695
  %v86 = vpow.pop %v85
  %v87 = vld [vmem:[#allocation3] sm:$0xff]
  %v88 = vmul.f32 %v86, %v87
  %90 = vset.pattern.permute.xlu0 0
  %91 = vperm.xlu0 %90, %v83
  %v92 = vpop.permute.xlu0 %91
  %v94 = vsub.f32 %v77, %v92
  %v95 = vmul.f32 %v94, 1.442695
  %v96 = vpow.pop %v95
  %v97 = vsel %vm79, %v96, 0.0
  %98 = vadd.xlane.f32.xlu0 %v97
  %v99 = vpop.xlane.xlu0 %98
  %v100 = vadd.f32 %v88, %v99
  %vm101 = vcmask 7168
  %102 = vst.msk [vmem:[#allocation3] sm:$0xff] %vm101, %v100
  %103 = vst.msk [vmem:[#allocation2] sm:$0xff] %vm101, %v83
  // Predicated region
  $region18: #{tpu_custom_call.1} parent=0 // pred_check
    %p104 = pneg %p15
  $region19: #{tpu_custom_call.1} parent=0 // pred_check_branch
    %106 = sbr.rel (%p104) target = $region21
  $region20: #{tpu_custom_call.1} parent=0 // pred_region
    %v107 = vld [vmem:[#allocation2] sm:$0xff]
    %v108 = vld [vmem:[#allocation3] sm:$0xff]
    %v109 = vlog2.pop %v108
    %v110 = vmul.f32 %v109, 0.6931472
    %v111 = vadd.f32 %v107, %v110
    %vm112 = vcmp.lt.s32.totalorder %v68, 8
    %v113 = vld [vmem:[%s0] sm:$0xff]
    %v114 = vsub.f32 %v111, %v113
    %v115 = vsel %vm112, %v114, 0.0
    %116 = vst.msk [vmem:[%s3] sm:$0xff] %vm101, %v115
  $region21: #{tpu_custom_call.1} parent=0 // pred_fallthru
    _
  // Predicated region
  $region22: #{tpu_custom_call.1} parent=0 // pred_check
    _
  $region23: #{tpu_custom_call.1} parent=0 // pred_check_branch
    %118 = sbr.rel (0) target = $region25
  $region24: #{tpu_custom_call.1} parent=0 // pred_region
    _
  $region25: #{tpu_custom_call.1} parent=0 // pred_fallthru
    _
  // Predicated region
  $region26: #{tpu_custom_call.1} parent=0 // pred_check
    _
  $region27: #{tpu_custom_call.1} parent=0 // pred_check_branch
    %120 = sbr.rel (0) target = $region29
  $region28: #{tpu_custom_call.1} parent=0 // pred_region
    _
  $region29: #{tpu_custom_call.1} parent=0 // pred_fallthru
    _

</llo_original>
